<compile_context>
chip_gen: v5e
topology: v5e:2x2
jax: 0.10.0
libtpu: 0.0.40
codegen_flags: <defaults>
</compile_context>

<pallas_src>
import functools
import math

import jax
import jax.numpy as jnp
from jax.experimental import pallas as pl
from jax.experimental.pallas import tpu as pltpu

_LANES = 128
_SUBLANES = 8
_LOG_LO = math.log(1e-8)        # == log(clip lower bound)
_LOG_HI = math.log1p(-1e-8)     # == log(clip upper bound)


def _round_up(x, m):
    return ((x + m - 1) // m) * m


def _pick_tile_rows(r_pad, max_rows):
    """Largest multiple-of-8 divisor of r_pad that is <= max_rows."""
    q = r_pad // _SUBLANES
    best = 1
    d = 1
    while d * d <= q:
        if q % d == 0:
            if _SUBLANES * d <= max_rows:
                best = max(best, d)
            e = q // d
            if _SUBLANES * e <= max_rows:
                best = max(best, e)
        d += 1
    return _SUBLANES * best


def _loss_chunk(x_ref, t_ref, r0, rows, *, gamma, cw, n_classes):
    """Per-element focal loss for rows [r0, r0+rows) of the current block.

    Log-space form: log_pt = (x_t - m) - log(sum_c exp(x_c - m)).  Padded
    lanes carry the out-of-range class id, making w = 0 and x_t = 0, so their
    loss is exactly 0 (padded logits are 0, everything stays finite).
    """
    t = t_ref[0, pl.ds(r0, rows), :].astype(jnp.int32)
    xs = [x_ref[0, c, pl.ds(r0, rows), :].astype(jnp.float32)
          for c in range(n_classes)]

    # Class axis (tiny) statically unrolled: pure elementwise VPU/EUP work.
    m = xs[0]
    for c in range(1, n_classes):
        m = jnp.maximum(m, xs[c])

    denom = None
    x_t = None
    w = None
    for c in range(n_classes):
        e = jnp.exp(xs[c] - m)
        denom = e if denom is None else denom + e
        sel = t == c
        w_c = jnp.float32(cw[c])                        # compile-time constant
        x_t = jnp.where(sel, xs[c], 0.0) if x_t is None else jnp.where(sel, xs[c], x_t)
        w = jnp.where(sel, w_c, 0.0) if w is None else jnp.where(sel, w_c, w)

    log_pt = (x_t - m) - jnp.log(denom)
    log_pt = jnp.clip(log_pt, _LOG_LO, _LOG_HI)         # == clip(pt, 1e-8, 1-1e-8)
    pt = jnp.exp(log_pt)
    one_minus_pt = 1.0 - pt
    if gamma == 2:                                      # pure VPU multiply path
        focal = one_minus_pt * one_minus_pt
    elif gamma == 1:
        focal = one_minus_pt
    elif gamma == 0:
        focal = jnp.ones_like(one_minus_pt)
    else:
        focal = jnp.power(one_minus_pt, jnp.float32(gamma))
    return -w * focal * log_pt


def _focal_partial_kernel(x_ref, t_ref, out_ref, *, gamma, cw, n_classes,
                          tr, chunk):
    """Per-tile partial sums, folded to a vreg-shaped (8,128) accumulator."""
    n_chunks = tr // chunk

    def body(i, acc):
        r0 = pl.multiple_of(i * chunk, chunk)
        loss = _loss_chunk(x_ref, t_ref, r0, chunk,
                           gamma=gamma, cw=cw, n_classes=n_classes)
        # (chunk,128) -> (8,128) via elementwise vreg adds; no XLU reduce here.
        return acc + loss.reshape(chunk // _SUBLANES, _SUBLANES, _LANES).sum(axis=0)

    acc = jax.lax.fori_loop(0, n_chunks, body,
                            jnp.zeros((_SUBLANES, _LANES), jnp.float32),
                            unroll=min(n_chunks, 8))
    out_ref[0, 0, :, :] = acc


def _focal_elem_kernel(x_ref, t_ref, loss_ref, *, gamma, cw, n_classes,
                       tr, chunk):
    n_chunks = tr // chunk

    def body(i, carry):
        r0 = pl.multiple_of(i * chunk, chunk)
        loss_ref[0, pl.ds(r0, chunk), :] = _loss_chunk(
            x_ref, t_ref, r0, chunk, gamma=gamma, cw=cw, n_classes=n_classes)
        return carry

    jax.lax.fori_loop(0, n_chunks, body, 0, unroll=min(n_chunks, 8))


def focal_loss(logit, target, class_weight=None, gamma=2,
               size_average=True, max_rows_per_block=2048, sub_chunk_rows=64):
    """logit: (B, C, D, H, W); target: int array with B*D*H*W elements."""
    B, C, D, H, W = logit.shape
    S = D * H * W
    if class_weight is None:
        class_weight = (1.0,) * C
    cw = tuple(float(v) for v in class_weight)
    assert len(cw) == C

    R = pl.cdiv(S, _LANES)
    R_pad = _round_up(R, _SUBLANES)            # only ever pads the ragged tail
    S_pad = R_pad * _LANES
    tr = _pick_tile_rows(R_pad, max_rows_per_block)   # tr | R_pad, tr % 8 == 0
    n_tiles = R_pad // tr
    chunk = math.gcd(tr, sub_chunk_rows)

    # int8 targets cut ~19% of the HBM stream; only when tiles/sub-chunks are
    # aligned to the packed int8 (32,128) layout.
    use_i8 = (tr % 32 == 0) and (chunk % 32 == 0)
    t_dtype = jnp.int8 if use_i8 else jnp.int32

    # Free, contiguous reshapes (no NCDHW->NDHWC transpose pass).
    x = logit.reshape(B, C, S)
    t = target.reshape(B, S).astype(t_dtype)
    if S_pad != S:
        # Only hit when S % 1024 != 0.  Padded targets get the out-of-range
        # class id C -> zero loss in-kernel; padded logits are 0 (finite).
        x = jnp.pad(x, ((0, 0), (0, 0), (0, S_pad - S)))
        t = jnp.pad(t, ((0, 0), (0, S_pad - S)), constant_values=C)
    x = x.reshape(B, C, R_pad, _LANES)
    t = t.reshape(B, R_pad, _LANES)

    grid = (B, n_tiles)
    in_specs = [
        pl.BlockSpec((1, C, tr, _LANES), lambda b, j: (b, 0, j, 0)),   # logits
        pl.BlockSpec((1, tr, _LANES), lambda b, j: (b, j, 0)),         # targets
    ]

    if size_average:
        kernel = functools.partial(
            _focal_partial_kernel, gamma=gamma, cw=cw, n_classes=C,
            tr=tr, chunk=chunk)
        partials = pl.pallas_call(
            kernel,
            out_shape=jax.ShapeDtypeStruct((B, n_tiles, _SUBLANES, _LANES),
                                           jnp.float32),
            grid_spec=pltpu.PrefetchScalarGridSpec(
                num_scalar_prefetch=0,
                grid=grid,
                in_specs=in_specs,
                out_specs=pl.BlockSpec((1, 1, _SUBLANES, _LANES),
                                       lambda b, j: (b, j, 0, 0)),
            ),
            compiler_params=pltpu.CompilerParams(
                dimension_semantics=("parallel", "parallel"),
                vmem_limit_bytes=32 * 1024 * 1024),
        )(x, t)
        # Only cross-lane reduce in the pipeline: tiny (B, n_tiles, 8, 128).
        return jnp.sum(partials) / jnp.float32(B * S)

    kernel = functools.partial(
        _focal_elem_kernel, gamma=gamma, cw=cw, n_classes=C, tr=tr, chunk=chunk)
    loss = pl.pallas_call(
        kernel,
        out_shape=jax.ShapeDtypeStruct((B, R_pad, _LANES), jnp.float32),
        grid_spec=pltpu.PrefetchScalarGridSpec(
            num_scalar_prefetch=0,
            grid=grid,
            in_specs=in_specs,
            out_specs=pl.BlockSpec((1, tr, _LANES), lambda b, j: (b, j, 0)),
        ),
        compiler_params=pltpu.CompilerParams(
            dimension_semantics=("parallel", "parallel"),
            vmem_limit_bytes=32 * 1024 * 1024),
    )(x, t)
    # TODO(synk): the (N, 1) shape matches the PyTorch module; consumers that
    # accept (B, S) could skip this extra slice/reshape copy pass.
    return loss.reshape(B, S_pad)[:, :S].reshape(-1, 1)


def _reference_focal_loss(logit, target, class_weight, gamma=2,
                          size_average=True):
    B, C, D, H, W = logit.shape
    x = jnp.transpose(logit, (0, 2, 3, 4, 1)).reshape(-1, C).astype(jnp.float32)
    t = target.reshape(-1).astype(jnp.int32)
    p = jax.nn.softmax(x, axis=1)
    pt = jnp.take_along_axis(p, t[:, None], axis=1)
    pt = jnp.clip(pt, 1e-8, 1.0 - 1e-8)
    w = jnp.asarray(class_weight, jnp.float32)[t][:, None]
    loss = -w * (1.0 - pt) ** gamma * jnp.log(pt)
    return jnp.mean(loss) if size_average else loss


if __name__ == "__main__":
    key = jax.random.PRNGKey(0)
    cw = (1.0, 2.0, 0.5)

    # (shape, max_rows_per_block):
    #   aligned single tile / padded ragged-tail / multi-tile int32 /
    #   int8 + multi-chunk inner loop / int8 + multi-tile.
    cases = [
        ((2, 3, 4, 16, 16), 2048),   # S=1024, aligned, 1 tile
        ((2, 3, 3, 10, 10), 2048),   # S=300, ragged tail -> padded targets=C
        ((2, 3, 8, 16, 16), 8),      # S=2048, 2 tiles/batch, int32 targets
        ((1, 3, 16, 32, 32), 2048),  # S=16384, tr=128, int8 targets, 2 chunks
        ((2, 3, 8, 32, 32), 32),     # S=8192, tr=32, int8 targets, 2 tiles
    ]

    for (B, C, D, H, W), max_tr in cases:
        key, k1, k2 = jax.random.split(key, 3)
        logit = jax.random.normal(k1, (B, C, D, H, W), dtype=jnp.float32)
        target = jax.random.randint(k2, (B, D, H, W), 0, C, dtype=jnp.int32)

        out = focal_loss(logit, target, class_weight=cw, gamma=2,
                         size_average=True, max_rows_per_block=max_tr)
        out = jax.block_until_ready(out)
        ref = _reference_focal_loss(logit, target, cw, gamma=2)
        assert jnp.allclose(out, ref, rtol=1e-4, atol=1e-6), (out, ref)

        per = focal_loss(logit, target, class_weight=cw, gamma=2,
                         size_average=False, max_rows_per_block=max_tr)
        per = jax.block_until_ready(per)
        ref_per = _reference_focal_loss(logit, target, cw, gamma=2,
                                        size_average=False)
        assert per.shape == ref_per.shape, (per.shape, ref_per.shape)
        assert jnp.allclose(per, ref_per, rtol=1e-4, atol=1e-6)

    print("KERNEL_OK")
</pallas_src>

<mosaic_0001>
module attributes {stable_mosaic.version = 11 : i64} {
  func.func @_focal_partial_kernel(%arg0: i32, %arg1: i32, %arg2: memref<1x3x8x128xf32, #tpu.memory_space<vmem>>, %arg3: memref<1x8x128xi32, #tpu.memory_space<vmem>>, %arg4: memref<1x1x8x128xf32, #tpu.memory_space<vmem>>) attributes {dimension_semantics = [#tpu.dimension_semantics<parallel>, #tpu.dimension_semantics<parallel>], iteration_bounds = array<i64: 2, 1>, scalar_prefetch = 0 : i64, scratch_operands = 0 : i64, tpu.core_type = #tpu.core_type<tc>, window_params = [{transform_indices = @transform_0, window_bounds = array<i64: 1, 3, 8, 128>}, {transform_indices = @transform_1, window_bounds = array<i64: 1, 8, 128>}, {transform_indices = @transform_2, window_bounds = array<i64: 1, 1, 8, 128>}]} {
    %cst = arith.constant 0.000000e+00 : f32
    %0 = vector.broadcast %cst : f32 to vector<8x128xf32>
    %c0_i32 = arith.constant 0 : i32
    %c8_i32 = arith.constant 8 : i32
    %1 = arith.muli %c0_i32, %c8_i32 : i32
    %2 = tpu.assume_multiple %1, 8 : i32
    %c0 = arith.constant 0 : index
    %3 = arith.index_cast %2 : i32 to index
    %c0_0 = arith.constant 0 : index
    %4 = vector.load %arg3[%c0, %3, %c0_0] : memref<1x8x128xi32, #tpu.memory_space<vmem>>, vector<1x8x128xi32>
    %5 = vector.shape_cast %4 : vector<1x8x128xi32> to vector<8x128xi32>
    %c0_1 = arith.constant 0 : index
    %c0_2 = arith.constant 0 : index
    %6 = arith.index_cast %2 : i32 to index
    %c0_3 = arith.constant 0 : index
    %7 = vector.load %arg2[%c0_1, %c0_2, %6, %c0_3] : memref<1x3x8x128xf32, #tpu.memory_space<vmem>>, vector<1x1x8x128xf32>
    %8 = vector.shape_cast %7 : vector<1x1x8x128xf32> to vector<8x128xf32>
    %c0_4 = arith.constant 0 : index
    %c1 = arith.constant 1 : index
    %9 = arith.index_cast %2 : i32 to index
    %c0_5 = arith.constant 0 : index
    %10 = vector.load %arg2[%c0_4, %c1, %9, %c0_5] : memref<1x3x8x128xf32, #tpu.memory_space<vmem>>, vector<1x1x8x128xf32>
    %11 = vector.shape_cast %10 : vector<1x1x8x128xf32> to vector<8x128xf32>
    %c0_6 = arith.constant 0 : index
    %c2 = arith.constant 2 : index
    %12 = arith.index_cast %2 : i32 to index
    %c0_7 = arith.constant 0 : index
    %13 = vector.load %arg2[%c0_6, %c2, %12, %c0_7] : memref<1x3x8x128xf32, #tpu.memory_space<vmem>>, vector<1x1x8x128xf32>
    %14 = vector.shape_cast %13 : vector<1x1x8x128xf32> to vector<8x128xf32>
    %15 = arith.maximumf %8, %11 : vector<8x128xf32>
    %16 = arith.maximumf %15, %14 : vector<8x128xf32>
    %17 = arith.subf %8, %16 : vector<8x128xf32>
    %18 = math.exp %17 : vector<8x128xf32>
    %c0_i32_8 = arith.constant 0 : i32
    %19 = vector.broadcast %c0_i32_8 : i32 to vector<8x128xi32>
    %20 = arith.cmpi eq, %5, %19 : vector<8x128xi32>
    %cst_9 = arith.constant 0.000000e+00 : f32
    %21 = vector.broadcast %cst_9 : f32 to vector<8x128xf32>
    %22 = arith.select %20, %8, %21 : vector<8x128xi1>, vector<8x128xf32>
    %cst_10 = arith.constant 1.000000e+00 : f32
    %cst_11 = arith.constant 0.000000e+00 : f32
    %23 = vector.broadcast %cst_10 : f32 to vector<8x128xf32>
    %24 = vector.broadcast %cst_11 : f32 to vector<8x128xf32>
    %25 = arith.select %20, %23, %24 : vector<8x128xi1>, vector<8x128xf32>
    %26 = arith.subf %11, %16 : vector<8x128xf32>
    %27 = math.exp %26 : vector<8x128xf32>
    %28 = arith.addf %18, %27 : vector<8x128xf32>
    %c1_i32 = arith.constant 1 : i32
    %29 = vector.broadcast %c1_i32 : i32 to vector<8x128xi32>
    %30 = arith.cmpi eq, %5, %29 : vector<8x128xi32>
    %31 = arith.select %30, %11, %22 : vector<8x128xi1>, vector<8x128xf32>
    %cst_12 = arith.constant 2.000000e+00 : f32
    %32 = vector.broadcast %cst_12 : f32 to vector<8x128xf32>
    %33 = arith.select %30, %32, %25 : vector<8x128xi1>, vector<8x128xf32>
    %34 = arith.subf %14, %16 : vector<8x128xf32>
    %35 = math.exp %34 : vector<8x128xf32>
    %36 = arith.addf %28, %35 : vector<8x128xf32>
    %c2_i32 = arith.constant 2 : i32
    %37 = vector.broadcast %c2_i32 : i32 to vector<8x128xi32>
    %38 = arith.cmpi eq, %5, %37 : vector<8x128xi32>
    %39 = arith.select %38, %14, %31 : vector<8x128xi1>, vector<8x128xf32>
    %cst_13 = arith.constant 5.000000e-01 : f32
    %40 = vector.broadcast %cst_13 : f32 to vector<8x128xf32>
    %41 = arith.select %38, %40, %33 : vector<8x128xi1>, vector<8x128xf32>
    %42 = arith.subf %39, %16 : vector<8x128xf32>
    %43 = math.log %36 : vector<8x128xf32>
    %44 = arith.subf %42, %43 : vector<8x128xf32>
    %cst_14 = arith.constant -18.420681 : f32
    %cst_15 = arith.constant -9.99999993E-9 : f32
    %45 = vector.broadcast %cst_14 : f32 to vector<8x128xf32>
    %46 = arith.maximumf %45, %44 : vector<8x128xf32>
    %47 = vector.broadcast %cst_15 : f32 to vector<8x128xf32>
    %48 = arith.minimumf %47, %46 : vector<8x128xf32>
    %49 = math.exp %48 : vector<8x128xf32>
    %cst_16 = arith.constant 1.000000e+00 : f32
    %50 = vector.broadcast %cst_16 : f32 to vector<8x128xf32>
    %51 = arith.subf %50, %49 : vector<8x128xf32>
    %52 = arith.mulf %51, %51 : vector<8x128xf32>
    %cst_17 = arith.constant 0.000000e+00 : f32
    %53 = vector.broadcast %cst_17 : f32 to vector<8x128xf32>
    %54 = arith.subf %53, %41 : vector<8x128xf32>
    %55 = arith.mulf %54, %52 : vector<8x128xf32>
    %56 = arith.mulf %55, %48 : vector<8x128xf32>
    %57 = vector.shape_cast %56 : vector<8x128xf32> to vector<1x8x128xf32>
    %cst_18 = arith.constant dense<0.000000e+00> : vector<8x128xf32>
    %58 = vector.multi_reduction <add>, %57, %cst_18 [0] : vector<1x8x128xf32> to vector<8x128xf32>
    %59 = arith.addf %0, %58 : vector<8x128xf32>
    %c1_i32_19 = arith.constant 1 : i32
    %c0_20 = arith.constant 0 : index
    %c0_21 = arith.constant 0 : index
    %c0_22 = arith.constant 0 : index
    %c0_23 = arith.constant 0 : index
    %60 = vector.load %arg4[%c0_20, %c0_21, %c0_22, %c0_23] : memref<1x1x8x128xf32, #tpu.memory_space<vmem>>, vector<1x1x8x128xf32>
    %61 = vector.shape_cast %60 : vector<1x1x8x128xf32> to vector<8x128xf32>
    %62 = vector.shape_cast %59 : vector<8x128xf32> to vector<1x1x8x128xf32>
    tpu.vector_store %arg4[%c0_20, %c0_21, %c0_22, %c0_23], %62 {strides = array<i32>} : memref<1x1x8x128xf32, #tpu.memory_space<vmem>>, vector<1x1x8x128xf32>,
    return
  }
  func.func @transform_0(%arg0: i32, %arg1: i32) -> (i32, i32, i32, i32) {
    %c0_i32 = arith.constant 0 : i32
    %c0_i32_0 = arith.constant 0 : i32
    %c0_i32_1 = arith.constant 0 : i32
    return %arg0, %c0_i32, %arg1, %c0_i32_0 : i32, i32, i32, i32
  }
  func.func @transform_1(%arg0: i32, %arg1: i32) -> (i32, i32, i32) {
    %c0_i32 = arith.constant 0 : i32
    %c0_i32_0 = arith.constant 0 : i32
    return %arg0, %arg1, %c0_i32 : i32, i32, i32
  }
  func.func @transform_2(%arg0: i32, %arg1: i32) -> (i32, i32, i32, i32) {
    %c0_i32 = arith.constant 0 : i32
    %c0_i32_0 = arith.constant 0 : i32
    %c0_i32_1 = arith.constant 0 : i32
    return %arg0, %arg1, %c0_i32, %c0_i32_0 : i32, i32, i32, i32
  }
}

</mosaic_0001>

<llo_original>
// kernel: tpu_custom_call.1
$region0: #{tpu_custom_call.1}
  #allocation0 [shape = 'u32[]', space=smem, size = 0x4, offset = 0x4, fixed_abs, tag = 'smem constant byte address 0x4 - core index']
  #allocation1 [shape = 'u32[72,128]{1,0:T(1,128)}', space=vmem, size = 0x9000, scoped, tag = 'internal scratch']
  %s0 = inlined_call_operand.hbm [shape: f32[2,3,8,128], index: 0, kind: input, shape index: {}]
  %s1 = inlined_call_operand.hbm [shape: s32[2,8,128], index: 1, kind: input, shape index: {}]
  %s2 = inlined_call_operand.hbm [shape: f32[2,1,8,128], index: 2, kind: output, shape index: {}]
  %s3 = sld [smem:[#allocation0]]
  $region49: #{tpu_custom_call.1} parent=0
    _
  %s5 = ssub.s32 1, %s3
  %s6 = scalar_select 0, %s5, %s3
  $region1: #{tpu_custom_call.1} parent=0
    #allocation2 [shape = 'u8[24576]{0}', space=vmem, size = 0x6000, scoped, tag = 'input window, operand 0']
    #allocation3 [shape = 's32[2]{0}', space=sflag, size = 0x8, scoped, tag = 'scoped memory for tpu_custom_call.1']
    #allocation4 [shape = 's32[2]{0}', space=sflag, size = 0x8, scoped, tag = 'scoped memory for tpu_custom_call.1']
    #allocation5 [shape = 'u8[8192]{0}', space=vmem, size = 0x2000, scoped, tag = 'input window, operand 1']
    #allocation6 [shape = 's32[2]{0}', space=sflag, size = 0x8, scoped, tag = 'scoped memory for tpu_custom_call.1']
    #allocation7 [shape = 'u8[8192]{0}', space=vmem, size = 0x2000, scoped, tag = 'output window, operand 0']
    %7 = vsyncpa [#allocation3], 0
    %s8 = scalar_lea.sflag [#allocation3], 1
    %9 = vsyncpa %s8, 0
    %10 = vsyncpa [#allocation6], 0
    %s11 = scalar_lea.sflag [#allocation6], 1
    %12 = vsyncpa %s11, 0
    %13 = vsyncpa [#allocation4], 0
    %s14 = scalar_lea.sflag [#allocation4], 1
    %15 = vsyncpa %s14, 0
    loop: start=0, step=1, limit=4
    $region2: #{tpu_custom_call.1} parent=1 // loop_pre_header
      _
    $region3: #{tpu_custom_call.1} parent=1 // loop_header
      %s17 = sphi 0, %s21
      %p18 = scmp.ge.s32.totalorder %s17, 4
      %s24 = sphi 0, %s36
      %s25 = sphi 0, %s32
      %s26 = sphi 0, %s24
      %s27 = sphi 0, %s25
      %s28 = sphi 0, %s26
      %s29 = sphi 0, %s27
      %s41 = sphi 0, %s43
      %s44 = sphi 0, %s41
      %s45 = sphi 0, %s44
      %s61 = sphi 0, %s45
      %s69 = sphi 0, %s71
      %s72 = sphi 0, %s69
      %s73 = sphi 0, %s72
      %s89 = sphi 0, %s73
      %s97 = sphi 0, %s99
      %s100 = sphi 0, %s97
      %s101 = sphi 0, %s100
      %s117 = sphi 0, %s101
    $region4: #{tpu_custom_call.1} parent=1 // loop_header_branch
      %20 = sbr.rel (%p18) target = $region8
    $region5: #{tpu_custom_call.1} parent=1 // loop_body
      %s22 = ssub.s32 %s17, 1
      %s23 = ssub.s32 %s17, 2
      %s30 = sadd.s32 1, %s25
      %p31 = scmp.ge.s32.totalorder %s30, 1
      %s32 = scalar_select %p31, 0, %s30
      %s33 = sadd.s32 1, %s24
      %s34 = scalar_select %p31, %s33, %s24
      %p35 = scmp.ge.s32.totalorder %s34, 2
      %s36 = scalar_select %p35, 0, %s34
      %s37 = ssub.s32 %s24, %s36
      %s38 = ssub.s32 %s25, %s32
      %s39 = sor.u32 %s37, %s38
      %p40 = scmp.eq.s32.totalorder %s39, 0
      %s42 = sadd.s32 %s41, 1
      %s43 = scalar_select %p40, %s41, %s42
      %p46 = pneg %p40
      %p47 = scmp.eq.s32.totalorder %s17, 1
      %p48 = por %p46, %p47
      %p49 = scmp.ne.s32.totalorder %s41, %s44
      %p50 = scmp.eq.s32.totalorder %s17, 0
      %p51 = por %p49, %p50
      %p52 = scmp.ne.s32.totalorder %s41, %s44
      %p53 = scmp.eq.s32.totalorder %s22, 1
      %p54 = por %p52, %p53
      %p55 = scmp.ne.s32.totalorder %s44, %s45
      %p56 = scmp.eq.s32.totalorder %s22, 0
      %p57 = por %p55, %p56
      %p58 = scmp.ne.s32.totalorder %s44, %s45
      %p59 = scmp.eq.s32.totalorder %s23, 1
      %p60 = por %p58, %p59
      %p62 = scmp.ne.s32.totalorder %s45, %s61
      %p63 = scmp.eq.s32.totalorder %s23, 0
      %p64 = por %p62, %p63
      %s65 = ssub.s32 %s24, %s36
      %s66 = ssub.s32 %s25, %s32
      %s67 = sor.u32 %s65, %s66
      %p68 = scmp.eq.s32.totalorder %s67, 0
      %s70 = sadd.s32 %s69, 1
      %s71 = scalar_select %p68, %s69, %s70
      %p74 = pneg %p68
      %p75 = scmp.eq.s32.totalorder %s17, 1
      %p76 = por %p74, %p75
      %p77 = scmp.ne.s32.totalorder %s69, %s72
      %p78 = scmp.eq.s32.totalorder %s17, 0
      %p79 = por %p77, %p78
      %p80 = scmp.ne.s32.totalorder %s69, %s72
      %p81 = scmp.eq.s32.totalorder %s22, 1
      %p82 = por %p80, %p81
      %p83 = scmp.ne.s32.totalorder %s72, %s73
      %p84 = scmp.eq.s32.totalorder %s22, 0
      %p85 = por %p83, %p84
      %p86 = scmp.ne.s32.totalorder %s72, %s73
      %p87 = scmp.eq.s32.totalorder %s23, 1
      %p88 = por %p86, %p87
      %p90 = scmp.ne.s32.totalorder %s73, %s89
      %p91 = scmp.eq.s32.totalorder %s23, 0
      %p92 = por %p90, %p91
      %s93 = ssub.s32 %s24, %s36
      %s94 = ssub.s32 %s25, %s32
      %s95 = sor.u32 %s93, %s94
      %p96 = scmp.eq.s32.totalorder %s95, 0
      %s98 = sadd.s32 %s97, 1
      %s99 = scalar_select %p96, %s97, %s98
      %p102 = pneg %p96
      %p103 = scmp.eq.s32.totalorder %s17, 1
      %p104 = por %p102, %p103
      %p105 = scmp.ne.s32.totalorder %s97, %s100
      %p106 = scmp.eq.s32.totalorder %s17, 0
      %p107 = por %p105, %p106
      %p108 = scmp.ne.s32.totalorder %s97, %s100
      %p109 = scmp.eq.s32.totalorder %s22, 1
      %p110 = por %p108, %p109
      %p111 = scmp.ne.s32.totalorder %s100, %s101
      %p112 = scmp.eq.s32.totalorder %s22, 0
      %p113 = por %p111, %p112
      %p114 = scmp.ne.s32.totalorder %s100, %s101
      %p115 = scmp.eq.s32.totalorder %s23, 1
      %p116 = por %p114, %p115
      %p118 = scmp.ne.s32.totalorder %s101, %s117
      %p119 = scmp.eq.s32.totalorder %s23, 0
      %p120 = por %p118, %p119
      %p121 = scmp.le.s32.totalorder 1, %s17
      %p122 = scmp.lt.s32.totalorder %s17, 3
      %p123 = pnand %p121, %p122
      %p124 = pneg %p123
      // Predicated region
      $region9: #{tpu_custom_call.1} parent=5 // pred_check
        _
      $region10: #{tpu_custom_call.1} parent=5 // pred_check_branch
        %126 = sbr.rel (%p123) target = $region12
      $region11: #{tpu_custom_call.1} parent=5 // pred_region
        %s127 = ssub.s32 %s17, 1
      $region12: #{tpu_custom_call.1} parent=5 // pred_fallthru
        _
      %p128 = scmp.lt.s32.totalorder %s17, 2
      // Predicated region
      $region13: #{tpu_custom_call.1} parent=5 // pred_check
        %p129 = pneg %p128
      $region14: #{tpu_custom_call.1} parent=5 // pred_check_branch
        %131 = sbr.rel (%p129) target = $region16
      $region15: #{tpu_custom_call.1} parent=5 // pred_region
        // Predicated region
        $region17: #{tpu_custom_call.1} parent=15 // pred_check
          %p132 = pneg %p51
        $region18: #{tpu_custom_call.1} parent=15 // pred_check_branch
          %134 = sbr.rel (%p132) target = $region20
        $region19: #{tpu_custom_call.1} parent=15 // pred_region
          %s135 = sand.u32 %s41, 1
          %s136 = scalar_lea.sflag [#allocation3], %s135
          %s137 = sand.u32 %s41, 1
          %s138 = smul.addr %s137, 24
          %s139 = scalar_lea.vmem [#allocation2], %s138
          %141 = vsyncadd %s136, 0
          %s142 = smul.addr %s24, 3
          %s143 = sadd.s32 %s25, %s142
          %s144 = smul.addr %s143, 8
          %s145 = scalar_lea.hbm %s0, %s144
          %s146 = sshll.u32 %s145, 4
          %s147 = int_to_ptr.hbm [resolvable:$true] %s146
          %s148 = sshll.u32 %s139, 4
          %s149 = int_to_ptr.vmem [resolvable:$true] %s148
          %154 = dma.hbm_to_vmem [thread:$0]  %s147, 384, %s149, %s136, 128, 128, 8
        $region20: #{tpu_custom_call.1} parent=15 // pred_fallthru
          _
        // Predicated region
        $region21: #{tpu_custom_call.1} parent=15 // pred_check
          %p155 = pneg %p79
        $region22: #{tpu_custom_call.1} parent=15 // pred_check_branch
          %157 = sbr.rel (%p155) target = $region24
        $region23: #{tpu_custom_call.1} parent=15 // pred_region
          %s158 = sand.u32 %s69, 1
          %s159 = scalar_lea.sflag [#allocation6], %s158
          %s160 = sand.u32 %s69, 1
          %s161 = smul.addr %s160, 8
          %s162 = scalar_lea.vmem [#allocation5], %s161
          %164 = vsyncadd %s159, 0
          %s165 = sadd.s32 %s25, %s24
          %s166 = smul.addr %s165, 8
          %s167 = scalar_lea.hbm %s1, %s166
          %s169 = sshll.u32 %s167, 4
          %s170 = int_to_ptr.hbm [resolvable:$true] %s169
          %s171 = sshll.u32 %s162, 4
          %s172 = int_to_ptr.vmem [resolvable:$true] %s171
          %174 = dma.hbm_to_vmem [thread:$0]  %s170, 128, %s172, %s159
        $region24: #{tpu_custom_call.1} parent=15 // pred_fallthru
          _
      $region16: #{tpu_custom_call.1} parent=5 // pred_fallthru
        _
      %p175 = scmp.le.s32.totalorder 1, %s17
      %p176 = scmp.lt.s32.totalorder %s17, 3
      %p177 = pnand %p175, %p176
      %p178 = pneg %p177
      // Predicated region
      $region25: #{tpu_custom_call.1} parent=5 // pred_check
        _
      $region26: #{tpu_custom_call.1} parent=5 // pred_check_branch
        %180 = sbr.rel (%p177) target = $region28
      $region27: #{tpu_custom_call.1} parent=5 // pred_region
        %s181 = ssub.s32 %s17, 1
        %s182 = sand.u32 %s44, 1
        %s183 = scalar_lea.sflag [#allocation3], %s182
        %s184 = sand.u32 %s44, 1
        %s185 = smul.addr %s184, 24
        %s186 = scalar_lea.vmem [#allocation2], %s185
        // Predicated region
        $region29: #{tpu_custom_call.1} parent=27 // pred_check
          %p187 = pneg %p57
        $region30: #{tpu_custom_call.1} parent=27 // pred_check_branch
          %189 = sbr.rel (%p187) target = $region32
        $region31: #{tpu_custom_call.1} parent=27 // pred_region
          %191 = dma.done %s183, 384
        $region32: #{tpu_custom_call.1} parent=27 // pred_fallthru
          _
        %s192 = sand.u32 %s72, 1
        %s193 = scalar_lea.sflag [#allocation6], %s192
        %s194 = sand.u32 %s72, 1
        %s195 = smul.addr %s194, 8
        %s196 = scalar_lea.vmem [#allocation5], %s195
        // Predicated region
        $region33: #{tpu_custom_call.1} parent=27 // pred_check
          %p197 = pneg %p85
        $region34: #{tpu_custom_call.1} parent=27 // pred_check_branch
          %199 = sbr.rel (%p197) target = $region36
        $region35: #{tpu_custom_call.1} parent=27 // pred_region
          %201 = dma.done %s193, 128
        $region36: #{tpu_custom_call.1} parent=27 // pred_fallthru
          _
        %s202 = sand.u32 %s44, 1
        %s203 = scalar_lea.sflag [#allocation3], %s202
        %s204 = sand.u32 %s44, 1
        %s205 = smul.addr %s204, 24
        %s206 = scalar_lea.vmem [#allocation2], %s205
        %p207 = pneg %p57
        %p208 = pneg %p54
        %s209 = sand.u32 %s72, 1
        %s210 = scalar_lea.sflag [#allocation6], %s209
        %s211 = sand.u32 %s72, 1
        %s212 = smul.addr %s211, 8
        %s213 = scalar_lea.vmem [#allocation5], %s212
        %p214 = pneg %p85
        %p215 = pneg %p82
        %p216 = pneg %p113
        %p217 = pneg %p110
        %s218 = sand.u32 %s100, 1
        %s219 = scalar_lea.sflag [#allocation4], %s218
        %s220 = sand.u32 %s100, 1
        %s221 = smul.addr %s220, 8
        %s222 = scalar_lea.vmem [#allocation7], %s221
        %v223 = vld [vmem:[%s196] sm:$0xff]
        %v224 = vld [vmem:[%s186] sm:$0xff]
        %s225 = sadd.s32 0, 8
        %s226 = scalar_lea.vmem %s186, %s225 [#allocation2]
        %v227 = vld [vmem:[%s226] sm:$0xff]
        %s228 = sadd.s32 0, 16
        %s229 = scalar_lea.vmem %s186, %s228 [#allocation2]
        %v230 = vld [vmem:[%s229] sm:$0xff]
        %v231 = vmax.f32 %v224, %v227
        %v232 = vmax.f32 %v231, %v230
        %v233 = vsub.f32 %v224, %v232
        %v234 = vmul.f32 %v233, 1.442695
        %v235 = vpow.pop %v234
        %vm236 = vcmp.eq.s32.totalorder %v223, 0
        %v237 = vsel %vm236, %v224, 0.0
        %v238 = vsel %vm236, 1.0, 0.0
        %v239 = vsub.f32 %v227, %v232
        %v240 = vmul.f32 %v239, 1.442695
        %v241 = vpow.pop %v240
        %v242 = vadd.f32 %v235, %v241
        %vm243 = vcmp.eq.s32.totalorder %v223, 1
        %v244 = vsel %vm243, %v227, %v237
        %v245 = vsel %vm243, 2.0, %v238
        %v246 = vsub.f32 %v230, %v232
        %v247 = vmul.f32 %v246, 1.442695
        %v248 = vpow.pop %v247
        %v249 = vadd.f32 %v242, %v248
        %vm250 = vcmp.eq.s32.totalorder %v223, 2
        %v251 = vsel %vm250, %v230, %v244
        %v252 = vsel %vm250, 0.5, %v245
        %v253 = vsub.f32 %v251, %v232
        %v254 = vlog2.pop %v249
        %v255 = vmul.f32 %v254, 0.6931472
        %v256 = vsub.f32 %v253, %v255
        %v257 = vmax.f32 %v256, -18.420681
        %v258 = vmin.f32 %v257, -1e-08
        %v259 = vmul.f32 %v258, 1.442695
        %v260 = vpow.pop %v259
        %v261 = vsub.f32 1.0, %v260
        %v262 = vmul.f32 %v261, %v261
        %v263 = vsub.f32 0.0, %v252
        %v264 = vmul.f32 %v263, %v262
        %v265 = vmul.f32 %v264, %v258
        %v266 = vadd.f32 %v265, 0.0
        %v267 = vadd.f32 %v266, 0.0
        %268 = vst [vmem:[%s222] sm:$0xff] %v267
        %s269 = sand.u32 %s100, 1
        %s270 = scalar_lea.sflag [#allocation4], %s269
        %s271 = sand.u32 %s100, 1
        %s272 = smul.addr %s271, 8
        %s273 = scalar_lea.vmem [#allocation7], %s272
        // Predicated region
        $region37: #{tpu_custom_call.1} parent=27 // pred_check
          %p274 = pneg %p110
        $region38: #{tpu_custom_call.1} parent=27 // pred_check_branch
          %276 = sbr.rel (%p274) target = $region40
        $region39: #{tpu_custom_call.1} parent=27 // pred_region
          %278 = vsyncadd %s270, 0
          %s279 = sadd.s32 %s27, %s26
          %s280 = smul.addr %s279, 8
          %s281 = scalar_lea.hbm %s2, %s280
          %s283 = sshll.u32 %s273, 4
          %s284 = int_to_ptr.vmem [resolvable:$true] %s283
          %s285 = sshll.u32 %s281, 4
          %s286 = int_to_ptr.hbm [resolvable:$true] %s285
          %288 = dma.vmem_to_hbm [thread:$0]  %s284, 128, %s286, %s270
        $region40: #{tpu_custom_call.1} parent=27 // pred_fallthru
          _
      $region28: #{tpu_custom_call.1} parent=5 // pred_fallthru
        _
      %p289 = scmp.le.s32.totalorder 2, %s17
      // Predicated region
      $region41: #{tpu_custom_call.1} parent=5 // pred_check
        %p290 = pneg %p289
      $region42: #{tpu_custom_call.1} parent=5 // pred_check_branch
        %292 = sbr.rel (%p290) target = $region44
      $region43: #{tpu_custom_call.1} parent=5 // pred_region
        %s293 = ssub.s32 %s17, 2
        // Predicated region
        $region45: #{tpu_custom_call.1} parent=43 // pred_check
          %p294 = pneg %p116
        $region46: #{tpu_custom_call.1} parent=43 // pred_check_branch
          %296 = sbr.rel (%p294) target = $region48
        $region47: #{tpu_custom_call.1} parent=43 // pred_region
          %s297 = sand.u32 %s101, 1
          %s298 = scalar_lea.sflag [#allocation4], %s297
          %s299 = sand.u32 %s101, 1
          %s300 = smul.addr %s299, 8
          %s301 = scalar_lea.vmem [#allocation7], %s300
          %303 = dma.done %s298, 128
        $region48: #{tpu_custom_call.1} parent=43 // pred_fallthru
          _
      $region44: #{tpu_custom_call.1} parent=5 // pred_fallthru
        _
    $region6: #{tpu_custom_call.1} parent=1 // loop_footer
      %s21 = sadd.s32 1, %s17
    $region7: #{tpu_custom_call.1} parent=1 // loop_footer_branch
      %16 = sbr.rel target = $region3
    $region8: #{tpu_custom_call.1} parent=1 // loop_exit
      _
    %304 = vsyncpa [#allocation3], 1
    %s305 = scalar_lea.sflag [#allocation3], 1
    %306 = vsyncpa %s305, 1
    %307 = vsyncpa [#allocation6], 1
    %s308 = scalar_lea.sflag [#allocation6], 1
    %309 = vsyncpa %s308, 1
    %310 = vsyncpa [#allocation4], 1
    %s311 = scalar_lea.sflag [#allocation4], 1
    %312 = vsyncpa %s311, 1

</llo_original>
